<compile_context>
chip_gen: v5e
topology: v5e:2x2
jax: 0.10.0
libtpu: 0.0.40
codegen_flags: <defaults>
</compile_context>

<pallas_src>
import functools

import jax
import jax.numpy as jnp
from jax.experimental import pallas as pl
from jax.experimental.pallas import tpu as pltpu

NUM_CLASSES = 5
_LANE = 128
_SUBLANE = 8
_X_BYTES_PER_STEP = 4 * 1024 * 1024    # target x bytes DMA'd per grid step
_VMEM_BUDGET = 20 * 1024 * 1024        # cap for double-buffered x tiles (v7x-safe)
_VMEM_LIMIT = 32 * 1024 * 1024         # explicit scoped-VMEM limit for Mosaic


# ----------------------------------------------------------------------------
# helpers
# ----------------------------------------------------------------------------
def _round_up(n, m):
    return ((n + m - 1) // m) * m


def _pack_factor(d):
    """How many logical rows to pack into the 128-lane axis."""
    if d < _LANE and _LANE % d == 0:
        return _LANE // d
    return 1


def _choose_tile(packed_rows, packed_d, itemsize):
    """Packed-row tile: ~_X_BYTES_PER_STEP of x per step, VMEM-capped, sublane-aligned."""
    row_bytes = _round_up(packed_d, _LANE) * itemsize
    tb = _X_BYTES_PER_STEP // row_bytes
    tb = min(tb, _VMEM_BUDGET // (2 * row_bytes))   # double-buffered x under budget
    tb = max((tb // _SUBLANE) * _SUBLANE, _SUBLANE)
    tb = min(tb, _round_up(packed_rows, _SUBLANE))
    return max(tb, _SUBLANE)


def _prepare_packed(x, w_t, b, stream_dtype):
    """Host-side row packing: x -> [B/P, P*D], W -> block-diag [P*D, P*C], b -> [1, P*C]."""
    B, D = x.shape
    C = w_t.shape[1]
    P = _pack_factor(D)
    b_pack = _round_up(B, P)
    if b_pack != B:
        x = jnp.pad(x, ((0, b_pack - B), (0, 0)))
    x_p = x.reshape(b_pack // P, P * D)
    w_bd = jnp.kron(jnp.eye(P, dtype=w_t.dtype), w_t)       # [P*D, P*C] block diagonal
    b_p = jnp.tile(b.reshape(1, C), (1, P))                 # [1, P*C]
    if stream_dtype is not None:
        x_p = x_p.astype(stream_dtype)
        w_bd = w_bd.astype(stream_dtype)
    return x_p, w_bd, b_p, P, C


# ----------------------------------------------------------------------------
# kernels
# ----------------------------------------------------------------------------
def _linear_kernel(x_ref, w_ref, b_ref, o_ref):
    # x: [TBp, P*D], w: [P*D, P*C], b: [1, P*C] -> o: [TBp, P*C]
    acc = jnp.dot(x_ref[...], w_ref[...], preferred_element_type=jnp.float32)
    o_ref[...] = (acc + b_ref[...]).astype(o_ref.dtype)


def _linear_ce_kernel(x_ref, w_ref, b_ref, y_ref, s_ref, st_ref, partial_ref,
                      *, total_b, tbp, pack, num_classes):
    # Fused logits + packed log-softmax + NLL; each grid step is independent and
    # writes its own partial sum (parallel across tiles / TensorCores).
    i = pl.program_id(0)

    logits = jnp.dot(x_ref[...], w_ref[...],
                     preferred_element_type=jnp.float32) + b_ref[...]        # [TBp, P*C]

    # Softmax shift = max over the packed row (upper bound for every group, so exp()
    # cannot overflow).  pack == 1 recovers the exact per-row max; for pack > 1 the
    # only loss is protection against >~88 logit dynamic range across the P rows
    # sharing a vreg row, which a Linear head never produces in practice.
    m = jnp.max(logits, axis=-1, keepdims=True)                              # [TBp, 1]
    e = jnp.exp(logits - m)                                                  # [TBp, P*C]
    # segmented (per logical row) sums done on the MXU via the group-indicator matrix
    group_sum = jnp.dot(e, s_ref[...], preferred_element_type=jnp.float32)   # [TBp, P]
    lse = m + jnp.log(group_sum)                                             # [TBp, P]

    # broadcast each logical row's label across its C lanes via a tiny matmul,
    # then one-hot gather the true-class logit (no dynamic gather on TPU vregs)
    y_lanes = jnp.dot(y_ref[...].astype(jnp.float32), st_ref[...],
                      preferred_element_type=jnp.float32)                    # [TBp, P*C]
    cls = (jax.lax.broadcasted_iota(jnp.int32, logits.shape, 1)
           % num_classes).astype(jnp.float32)
    picked = jnp.where(cls == y_lanes, logits, 0.0)
    true_logit = jnp.dot(picked, s_ref[...],
                         preferred_element_type=jnp.float32)                 # [TBp, P]

    nll = lse - true_logit                                                   # [TBp, P]

    # mask logical rows that are batch padding (pack padding and ragged last tile)
    rp = jax.lax.broadcasted_iota(jnp.int32, nll.shape, 0)
    g = jax.lax.broadcasted_iota(jnp.int32, nll.shape, 1)
    row_id = (i * tbp + rp) * pack + g
    partial = jnp.sum(jnp.where(row_id < total_b, nll, 0.0))
    partial_ref[...] = partial.reshape(1, 1, 1)


# ----------------------------------------------------------------------------
# wrappers
# ----------------------------------------------------------------------------
def linear_forward(x, w_t, b, *, stream_dtype=None, batch_rows=None):
    """x: [B, D] f32, w_t: [D, C] f32, b: [1, C] f32 -> logits [B, C] f32."""
    B, D = x.shape
    C = w_t.shape[1]
    x_p, w_bd, b_p, P, _ = _prepare_packed(x, w_t, b, stream_dtype)
    bp, dp = x_p.shape
    itemsize = jnp.dtype(x_p.dtype).itemsize

    tbp = batch_rows if batch_rows is not None else _choose_tile(bp, dp, itemsize)
    bp_pad = _round_up(bp, tbp)
    if bp_pad != bp:
        x_p = jnp.pad(x_p, ((0, bp_pad - bp), (0, 0)))

    cost = pl.CostEstimate(flops=2 * B * D * C, transcendentals=0,
                           bytes_accessed=B * D * itemsize + D * C * 4 + B * C * 4)

    out = pl.pallas_call(
        _linear_kernel,
        out_shape=jax.ShapeDtypeStruct((bp_pad, P * C), jnp.float32),
        grid=(bp_pad // tbp,),
        in_specs=[
            pl.BlockSpec((tbp, dp), lambda i: (i, 0)),       # streamed packed x tiles
            pl.BlockSpec((dp, P * C), lambda i: (0, 0)),     # resident block-diag weight
            pl.BlockSpec((1, P * C), lambda i: (0, 0)),      # resident bias
        ],
        out_specs=pl.BlockSpec((tbp, P * C), lambda i: (i, 0)),
        compiler_params=pltpu.CompilerParams(
            dimension_semantics=("parallel",),               # megacore-shardable on v7x
            vmem_limit_bytes=_VMEM_LIMIT),
        cost_estimate=cost,
    )(x_p, w_bd, b_p)
    return out[:bp].reshape(bp * P, C)[:B]


def linear_ce_loss(x, w_t, b, y, *, stream_dtype=None, batch_rows=None):
    """x: [B, D] f32, y: [B] / [B,1] int labels -> scalar mean cross-entropy."""
    B, D = x.shape
    C = w_t.shape[1]
    x_p, w_bd, b_p, P, _ = _prepare_packed(x, w_t, b, stream_dtype)
    bp, dp = x_p.shape
    itemsize = jnp.dtype(x_p.dtype).itemsize

    y = y.reshape(-1).astype(jnp.int32)                      # == y.squeeze().long()
    y = jnp.pad(y, (0, bp * P - B))
    y_p = y.reshape(bp, P)

    tbp = batch_rows if batch_rows is not None else _choose_tile(bp, dp, itemsize)
    bp_pad = _round_up(bp, tbp)
    if bp_pad != bp:
        x_p = jnp.pad(x_p, ((0, bp_pad - bp), (0, 0)))
        y_p = jnp.pad(y_p, ((0, bp_pad - bp), (0, 0)))
    grid_n = bp_pad // tbp

    # group-indicator matrices for segmented (per logical row) reductions on the MXU
    s = jnp.kron(jnp.eye(P, dtype=jnp.float32), jnp.ones((C, 1), jnp.float32))  # [P*C, P]
    s_t = jnp.transpose(s)                                                       # [P, P*C]

    kernel = functools.partial(_linear_ce_kernel, total_b=B, tbp=tbp,
                               pack=P, num_classes=C)
    cost = pl.CostEstimate(flops=2 * B * D * C + 8 * B * C,
                           transcendentals=B * C + B,
                           bytes_accessed=B * D * itemsize + B * 4 + D * C * 4)

    partials = pl.pallas_call(
        kernel,
        out_shape=jax.ShapeDtypeStruct((grid_n, 1, 1), jnp.float32),
        grid=(grid_n,),
        in_specs=[
            pl.BlockSpec((tbp, dp), lambda i: (i, 0)),       # streamed packed x tiles
            pl.BlockSpec((dp, P * C), lambda i: (0, 0)),     # resident block-diag weight
            pl.BlockSpec((1, P * C), lambda i: (0, 0)),      # resident bias
            pl.BlockSpec((tbp, P), lambda i: (i, 0)),        # streamed packed labels
            pl.BlockSpec((P * C, P), lambda i: (0, 0)),      # resident group indicator
            pl.BlockSpec((P, P * C), lambda i: (0, 0)),      # resident indicator^T
        ],
        out_specs=pl.BlockSpec((1, 1, 1), lambda i: (i, 0, 0)),  # per-tile partial sums
        compiler_params=pltpu.CompilerParams(
            dimension_semantics=("parallel",),               # independent tiles -> 2 TCs on v7x
            vmem_limit_bytes=_VMEM_LIMIT),
        cost_estimate=cost,
    )(x_p, w_bd, b_p, y_p, s, s_t)
    # final tiny reduction + divide-by-B in plain XLA
    return jnp.sum(partials) / jnp.float32(B)


def torch_model_forward(params, x, y=None, *, stream_dtype=None, batch_rows=None):
    """Mirrors TorchModel.forward: returns logits if y is None else mean CE loss."""
    w_t, b = params
    if y is None:
        return linear_forward(x, w_t, b, stream_dtype=stream_dtype, batch_rows=batch_rows)
    # TODO(synk): torch CrossEntropyLoss ignore_index / out-of-range-label errors are
    # not replicated (labels assumed in [0, NUM_CLASSES)).
    return linear_ce_loss(x, w_t, b, y, stream_dtype=stream_dtype, batch_rows=batch_rows)


# ----------------------------------------------------------------------------
# main
# ----------------------------------------------------------------------------
if __name__ == "__main__":
    key = jax.random.PRNGKey(0)

    def make_params(k, d, c=NUM_CLASSES):
        kw, kb = jax.random.split(k)
        bound = 1.0 / (d ** 0.5)
        w_t = jax.random.uniform(kw, (d, c), jnp.float32, minval=-bound, maxval=bound)
        b = jax.random.uniform(kb, (1, c), jnp.float32, minval=-bound, maxval=bound)
        return w_t, b

    def reference(x, w_t, b, y):
        logits = x @ w_t + b
        shift = logits - logits.max(axis=-1, keepdims=True)
        logp = shift - jnp.log(jnp.exp(shift).sum(-1, keepdims=True))
        loss = -jnp.take_along_axis(logp, y.reshape(-1, 1), axis=-1).mean()
        return logits, loss

    # (name, D, B, stream dtype, atol, rtol). batch_rows=8 forces a multi-tile grid with
    # ragged / pack padding so masking and the partial-sum reduction get exercised.
    configs = [
        ("packed_f32",   32, 83, None,          1e-5, 1e-5),  # D | 128 -> 4-row lane packing
        ("packed_bf16",  32, 83, jnp.bfloat16,  5e-2, 5e-2),  # bf16 x/W streaming (v6e/v7x)
        ("unpacked_f32", 40, 19, None,          1e-5, 1e-5),  # pack-factor-1 fallback path
    ]
    for name, d, bsz, sdt, atol, rtol in configs:
        key, k1, k2, k3 = jax.random.split(key, 4)
        w_t, b = make_params(k1, d)
        params = (w_t, b)
        x = jax.random.normal(k2, (bsz, d), jnp.float32)
        y = jax.random.randint(k3, (bsz, 1), 0, NUM_CLASSES, jnp.int32)

        logits = jax.block_until_ready(
            torch_model_forward(params, x, stream_dtype=sdt, batch_rows=8))
        loss = jax.block_until_ready(
            torch_model_forward(params, x, y, stream_dtype=sdt, batch_rows=8))

        ref_logits, ref_loss = reference(x, w_t, b, y)
        assert logits.shape == (bsz, NUM_CLASSES), f"{name}: bad logits shape"
        assert bool(jnp.isfinite(loss)), f"{name}: non-finite loss"
        assert jnp.allclose(logits, ref_logits, atol=atol, rtol=rtol), f"{name}: logits mismatch"
        assert jnp.allclose(loss, ref_loss, atol=atol, rtol=rtol), f"{name}: loss mismatch"

    print("KERNEL_OK")
</pallas_src>

<mosaic_0001>
module attributes {stable_mosaic.version = 11 : i64} {
  func.func @_linear_kernel(%arg0: i32, %arg1: memref<8x128xf32, #tpu.memory_space<vmem>>, %arg2: memref<128x20xf32, #tpu.memory_space<vmem>>, %arg3: memref<1x20xf32, #tpu.memory_space<vmem>>, %arg4: memref<8x20xf32, #tpu.memory_space<vmem>>) attributes {dimension_semantics = [#tpu.dimension_semantics<parallel>], iteration_bounds = array<i64: 3>, scalar_prefetch = 0 : i64, scratch_operands = 0 : i64, tpu.core_type = #tpu.core_type<tc>, window_params = [{transform_indices = @transform_0, window_bounds = array<i64: 8, 128>}, {pipeline_mode = #tpu.pipeline_mode<synchronous>, transform_indices = @transform_1, window_bounds = array<i64: 128, 20>}, {pipeline_mode = #tpu.pipeline_mode<synchronous>, transform_indices = @transform_2, window_bounds = array<i64: 1, 20>}, {transform_indices = @transform_3, window_bounds = array<i64: 8, 20>}]} {
    %c0 = arith.constant 0 : index
    %c0_0 = arith.constant 0 : index
    %0 = vector.load %arg1[%c0, %c0_0] : memref<8x128xf32, #tpu.memory_space<vmem>>, vector<8x128xf32>
    %c0_1 = arith.constant 0 : index
    %c0_2 = arith.constant 0 : index
    %1 = vector.load %arg2[%c0_1, %c0_2] : memref<128x20xf32, #tpu.memory_space<vmem>>, vector<128x20xf32>
    %cst = arith.constant dense<0.000000e+00> : vector<8x20xf32>
    %2 = tpu.matmul %0, %1, %cst {dimension_numbers = #tpu.dot_dimension_numbers<[1], [0], [0], [1], [0, 0, 1, 1], [], []>} : vector<8x128xf32>, vector<128x20xf32>, vector<8x20xf32> -> vector<8x20xf32>
    %c0_3 = arith.constant 0 : index
    %c0_4 = arith.constant 0 : index
    %3 = vector.load %arg3[%c0_3, %c0_4] : memref<1x20xf32, #tpu.memory_space<vmem>>, vector<1x20xf32>
    %4 = vector.broadcast %3 : vector<1x20xf32> to vector<8x20xf32>
    %5 = arith.addf %2, %4 : vector<8x20xf32>
    %c0_5 = arith.constant 0 : index
    %c0_6 = arith.constant 0 : index
    %6 = vector.load %arg4[%c0_5, %c0_6] : memref<8x20xf32, #tpu.memory_space<vmem>>, vector<8x20xf32>
    tpu.vector_store %arg4[%c0_5, %c0_6], %5 {strides = array<i32>} : memref<8x20xf32, #tpu.memory_space<vmem>>, vector<8x20xf32>,
    return
  }
  func.func @transform_0(%arg0: i32) -> (i32, i32) {
    %c0_i32 = arith.constant 0 : i32
    %c0_i32_0 = arith.constant 0 : i32
    return %arg0, %c0_i32 : i32, i32
  }
  func.func @transform_1(%arg0: i32) -> (i32, i32) {
    %c0_i32 = arith.constant 0 : i32
    %c0_i32_0 = arith.constant 0 : i32
    %c0_i32_1 = arith.constant 0 : i32
    return %c0_i32, %c0_i32_0 : i32, i32
  }
  func.func @transform_2(%arg0: i32) -> (i32, i32) {
    %c0_i32 = arith.constant 0 : i32
    %c0_i32_0 = arith.constant 0 : i32
    %c0_i32_1 = arith.constant 0 : i32
    return %c0_i32, %c0_i32_0 : i32, i32
  }
  func.func @transform_3(%arg0: i32) -> (i32, i32) {
    %c0_i32 = arith.constant 0 : i32
    %c0_i32_0 = arith.constant 0 : i32
    return %arg0, %c0_i32 : i32, i32
  }
}

</mosaic_0001>

<llo_original>
// kernel: tpu_custom_call.1
$region0: #{tpu_custom_call.1}
  #allocation0 [shape = 'u32[]', space=smem, size = 0x4, offset = 0x4, fixed_abs, tag = 'smem constant byte address 0x4 - core index']
  #allocation1 [shape = 'u32[72,128]{1,0:T(1,128)}', space=vmem, size = 0x9000, scoped, tag = 'internal scratch']
  %s0 = inlined_call_operand.vmem [shape: f32[24,128], index: 0, kind: input, shape index: {}]
  %s1 = inlined_call_operand.vmem [shape: f32[128,20], index: 1, kind: input, shape index: {}]
  %s2 = inlined_call_operand.vmem [shape: f32[1,20], index: 2, kind: input, shape index: {}]
  %s3 = inlined_call_operand.hbm [shape: f32[24,20], index: 3, kind: output, shape index: {}]
  %s4 = sld [smem:[#allocation0]]
  $region45: #{tpu_custom_call.1} parent=0
    _
  %s6 = ssub.s32 1, %s4
  %s7 = scalar_select 0, %s6, %s4
  $region1: #{tpu_custom_call.1} parent=0
    #allocation2 [shape = 'u8[8192]{0}', space=vmem, size = 0x2000, scoped, tag = 'output window, operand 0']
    #allocation3 [shape = 's32[2]{0}', space=sflag, size = 0x8, scoped, tag = 'scoped memory for tpu_custom_call.1']
    %8 = vsyncpa [#allocation3], 0
    %s9 = scalar_lea.sflag [#allocation3], 1
    %10 = vsyncpa %s9, 0
    loop: start=0, step=1, limit=5
    $region2: #{tpu_custom_call.1} parent=1 // loop_pre_header
      _
    $region3: #{tpu_custom_call.1} parent=1 // loop_header
      %s12 = sphi 0, %s16
      %p13 = scmp.ge.s32.totalorder %s12, 5
      %s22 = sphi 0, %s24
      %s25 = sphi 0, %s22
      %s26 = sphi 0, %s25
      %s42 = sphi 0, %s26
      %s46 = sphi 0, %s46
      %s48 = sphi 0, %s46
      %s49 = sphi 0, %s48
      %s63 = sphi 0, %s49
      %s67 = sphi 0, %s67
      %s69 = sphi 0, %s67
      %s70 = sphi 0, %s69
      %s84 = sphi 0, %s70
      %s90 = sphi 0, %s92
      %s93 = sphi 0, %s90
      %s94 = sphi 0, %s93
      %s110 = sphi 0, %s94
    $region4: #{tpu_custom_call.1} parent=1 // loop_header_branch
      %15 = sbr.rel (%p13) target = $region8
    $region5: #{tpu_custom_call.1} parent=1 // loop_body
      %s17 = ssub.s32 %s12, 1
      %s18 = ssub.s32 %s12, 2
      %s19 = sadd.s32 %s12, 1
      %s20 = ssub.s32 %s12, %s19
      %p21 = scmp.eq.s32.totalorder %s20, 0
      %s23 = sadd.s32 %s22, 1
      %s24 = scalar_select %p21, %s22, %s23
      %p27 = pneg %p21
      %p28 = scmp.eq.s32.totalorder %s12, 2
      %p29 = por %p27, %p28
      %p30 = scmp.ne.s32.totalorder %s22, %s25
      %p31 = scmp.eq.s32.totalorder %s12, 0
      %p32 = por %p30, %p31
      %p33 = scmp.ne.s32.totalorder %s22, %s25
      %p34 = scmp.eq.s32.totalorder %s17, 2
      %p35 = por %p33, %p34
      %p36 = scmp.ne.s32.totalorder %s25, %s26
      %p37 = scmp.eq.s32.totalorder %s17, 0
      %p38 = por %p36, %p37
      %p39 = scmp.ne.s32.totalorder %s25, %s26
      %p40 = scmp.eq.s32.totalorder %s18, 2
      %p41 = por %p39, %p40
      %p43 = scmp.ne.s32.totalorder %s26, %s42
      %p44 = scmp.eq.s32.totalorder %s18, 0
      %p45 = por %p43, %p44
      %s47 = sadd.s32 %s46, 1
      %p50 = scmp.eq.s32.totalorder %s12, 2
      %p51 = scmp.ne.s32.totalorder %s46, %s48
      %p52 = scmp.eq.s32.totalorder %s12, 0
      %p53 = por %p51, %p52
      %p54 = scmp.ne.s32.totalorder %s46, %s48
      %p55 = scmp.eq.s32.totalorder %s17, 2
      %p56 = por %p54, %p55
      %p57 = scmp.ne.s32.totalorder %s48, %s49
      %p58 = scmp.eq.s32.totalorder %s17, 0
      %p59 = por %p57, %p58
      %p60 = scmp.ne.s32.totalorder %s48, %s49
      %p61 = scmp.eq.s32.totalorder %s18, 2
      %p62 = por %p60, %p61
      %p64 = scmp.ne.s32.totalorder %s49, %s63
      %p65 = scmp.eq.s32.totalorder %s18, 0
      %p66 = por %p64, %p65
      %s68 = sadd.s32 %s67, 1
      %p71 = scmp.eq.s32.totalorder %s12, 2
      %p72 = scmp.ne.s32.totalorder %s67, %s69
      %p73 = scmp.eq.s32.totalorder %s12, 0
      %p74 = por %p72, %p73
      %p75 = scmp.ne.s32.totalorder %s67, %s69
      %p76 = scmp.eq.s32.totalorder %s17, 2
      %p77 = por %p75, %p76
      %p78 = scmp.ne.s32.totalorder %s69, %s70
      %p79 = scmp.eq.s32.totalorder %s17, 0
      %p80 = por %p78, %p79
      %p81 = scmp.ne.s32.totalorder %s69, %s70
      %p82 = scmp.eq.s32.totalorder %s18, 2
      %p83 = por %p81, %p82
      %p85 = scmp.ne.s32.totalorder %s70, %s84
      %p86 = scmp.eq.s32.totalorder %s18, 0
      %p87 = por %p85, %p86
      %s88 = ssub.s32 %s12, %s19
      %p89 = scmp.eq.s32.totalorder %s88, 0
      %s91 = sadd.s32 %s90, 1
      %s92 = scalar_select %p89, %s90, %s91
      %p95 = pneg %p89
      %p96 = scmp.eq.s32.totalorder %s12, 2
      %p97 = por %p95, %p96
      %p98 = scmp.ne.s32.totalorder %s90, %s93
      %p99 = scmp.eq.s32.totalorder %s12, 0
      %p100 = por %p98, %p99
      %p101 = scmp.ne.s32.totalorder %s90, %s93
      %p102 = scmp.eq.s32.totalorder %s17, 2
      %p103 = por %p101, %p102
      %p104 = scmp.ne.s32.totalorder %s93, %s94
      %p105 = scmp.eq.s32.totalorder %s17, 0
      %p106 = por %p104, %p105
      %p107 = scmp.ne.s32.totalorder %s93, %s94
      %p108 = scmp.eq.s32.totalorder %s18, 2
      %p109 = por %p107, %p108
      %p111 = scmp.ne.s32.totalorder %s94, %s110
      %p112 = scmp.eq.s32.totalorder %s18, 0
      %p113 = por %p111, %p112
      %p114 = scmp.le.s32.totalorder 1, %s12
      %p115 = scmp.lt.s32.totalorder %s12, 4
      %p116 = pnand %p114, %p115
      %p117 = pneg %p116
      // Predicated region
      $region9: #{tpu_custom_call.1} parent=5 // pred_check
        _
      $region10: #{tpu_custom_call.1} parent=5 // pred_check_branch
        %119 = sbr.rel (%p116) target = $region12
      $region11: #{tpu_custom_call.1} parent=5 // pred_region
        %s120 = ssub.s32 %s12, 1
        // Predicated region
        $region13: #{tpu_custom_call.1} parent=11 // pred_check
          %p121 = pneg %p59
        $region14: #{tpu_custom_call.1} parent=11 // pred_check_branch
          %123 = sbr.rel (%p121) target = $region16
        $region15: #{tpu_custom_call.1} parent=11 // pred_region
          _
        $region16: #{tpu_custom_call.1} parent=11 // pred_fallthru
          _
        // Predicated region
        $region17: #{tpu_custom_call.1} parent=11 // pred_check
          %p124 = pneg %p80
        $region18: #{tpu_custom_call.1} parent=11 // pred_check_branch
          %126 = sbr.rel (%p124) target = $region20
        $region19: #{tpu_custom_call.1} parent=11 // pred_region
          _
        $region20: #{tpu_custom_call.1} parent=11 // pred_fallthru
          _
      $region12: #{tpu_custom_call.1} parent=5 // pred_fallthru
        _
      %p127 = scmp.lt.s32.totalorder %s12, 3
      // Predicated region
      $region21: #{tpu_custom_call.1} parent=5 // pred_check
        %p128 = pneg %p127
      $region22: #{tpu_custom_call.1} parent=5 // pred_check_branch
        %130 = sbr.rel (%p128) target = $region24
      $region23: #{tpu_custom_call.1} parent=5 // pred_region
        // Predicated region
        $region25: #{tpu_custom_call.1} parent=23 // pred_check
          %p131 = pneg %p32
        $region26: #{tpu_custom_call.1} parent=23 // pred_check_branch
          %133 = sbr.rel (%p131) target = $region28
        $region27: #{tpu_custom_call.1} parent=23 // pred_region
          %p134 = scmp.lt.s32.totalorder %s12, 2
          %s135 = scalar_select %p134, %s12, 2
          %s136 = smul.addr %s135, 8
          %s137 = scalar_lea.vmem %s0, %s136
        $region28: #{tpu_custom_call.1} parent=23 // pred_fallthru
          _
      $region24: #{tpu_custom_call.1} parent=5 // pred_fallthru
        _
      %p138 = scmp.le.s32.totalorder 1, %s12
      %p139 = scmp.lt.s32.totalorder %s12, 4
      %p140 = pnand %p138, %p139
      %p141 = pneg %p140
      // Predicated region
      $region29: #{tpu_custom_call.1} parent=5 // pred_check
        _
      $region30: #{tpu_custom_call.1} parent=5 // pred_check_branch
        %143 = sbr.rel (%p140) target = $region32
      $region31: #{tpu_custom_call.1} parent=5 // pred_region
        %s144 = ssub.s32 %s12, 1
        %p145 = scmp.lt.s32.totalorder %s17, 2
        %s146 = scalar_select %p145, %s17, 2
        %s147 = smul.addr %s146, 8
        %s148 = scalar_lea.vmem %s0, %s147
        %p149 = pneg %p38
        %p150 = pneg %p35
        %p151 = pneg %p59
        %p152 = pneg %p56
        %p153 = pneg %p80
        %p154 = pneg %p77
        %p155 = pneg %p106
        %p156 = pneg %p103
        %s157 = sand.u32 %s93, 1
        %s158 = scalar_lea.sflag [#allocation3], %s157
        %s159 = sand.u32 %s93, 1
        %s160 = smul.addr %s159, 8
        %s161 = scalar_lea.vmem [#allocation2], %s160
        %p162 = scmp.lt.s32.totalorder %s17, 2
        %s163 = scalar_select %p162, %s17, 2
        %s164 = smul.addr %s163, 8
        %s165 = scalar_lea.vmem %s0, %s164
        %v166 = vld [vmem:[%s165] sm:$0xff]
        %v167 = vld [vmem:[%s1] sm:$0xff]
        %v168 = vld [vmem:[%s1 + $0x8] sm:$0xff]
        %v169 = vld [vmem:[%s1 + $0x10] sm:$0xff]
        %v170 = vld [vmem:[%s1 + $0x18] sm:$0xff]
        %v171 = vld [vmem:[%s1 + $0x20] sm:$0xff]
        %v172 = vld [vmem:[%s1 + $0x28] sm:$0xff]
        %v173 = vld [vmem:[%s1 + $0x30] sm:$0xff]
        %v174 = vld [vmem:[%s1 + $0x38] sm:$0xff]
        %v175 = vld [vmem:[%s1 + $0x40] sm:$0xff]
        %v176 = vld [vmem:[%s1 + $0x48] sm:$0xff]
        %v177 = vld [vmem:[%s1 + $0x50] sm:$0xff]
        %v178 = vld [vmem:[%s1 + $0x58] sm:$0xff]
        %v179 = vld [vmem:[%s1 + $0x60] sm:$0xff]
        %v180 = vld [vmem:[%s1 + $0x68] sm:$0xff]
        %v181 = vld [vmem:[%s1 + $0x70] sm:$0xff]
        %v182 = vld [vmem:[%s1 + $0x78] sm:$0xff]
        %v183 = vld [vmem:[%s2] sm:$0x1]
        %v185 = vperm.slane %v183, 0
        %187 = vmatpush.msra.mxu0 %v182
        %188 = vmatpush.msra.mxu0 %v181
        %189 = vmatpush.msra.mxu0 %v180
        %190 = vmatpush.msra.mxu0 %v179
        %191 = vmatpush.msra.mxu0 %v178
        %192 = vmatpush.msra.mxu0 %v177
        %193 = vmatpush.msra.mxu0 %v176
        %194 = vmatpush.msra.mxu0 %v175
        %195 = vmatpush.msra.mxu0 %v174
        %196 = vmatpush.msra.mxu0 %v173
        %197 = vmatpush.msra.mxu0 %v172
        %198 = vmatpush.msra.mxu0 %v171
        %199 = vmatpush.msra.mxu0 %v170
        %200 = vmatpush.msra.mxu0 %v169
        %201 = vmatpush.msra.mxu0 %v168
        %202 = vmatpush.msra.mxu0 %v167
        %203 = vmatmul.f32.gmra.mxu0 %v166
        %v204 = vpop.f32.mrf.mxu0
        %v205 = vadd.f32 %v185, %v204
        %206 = vdwg.mxu0
        %vm207 = vcmask 162816
        %208 = vst.msk [vmem:[%s161] sm:$0xff] %vm207, %v205
        %s209 = sand.u32 %s93, 1
        %s210 = scalar_lea.sflag [#allocation3], %s209
        %s211 = sand.u32 %s93, 1
        %s212 = smul.addr %s211, 8
        %s213 = scalar_lea.vmem [#allocation2], %s212
        // Predicated region
        $region33: #{tpu_custom_call.1} parent=31 // pred_check
          %p214 = pneg %p103
        $region34: #{tpu_custom_call.1} parent=31 // pred_check_branch
          %216 = sbr.rel (%p214) target = $region36
        $region35: #{tpu_custom_call.1} parent=31 // pred_region
          %218 = vsyncadd %s210, 0
          %s219 = smul.addr %s17, 8
          %s220 = scalar_lea.hbm %s3, %s219
          %s222 = sshll.u32 %s213, 4
          %s223 = int_to_ptr.vmem [resolvable:$true] %s222
          %s224 = sshll.u32 %s220, 4
          %s225 = int_to_ptr.hbm [resolvable:$true] %s224
          %227 = dma.vmem_to_hbm [thread:$0]  %s223, 128, %s225, %s210
        $region36: #{tpu_custom_call.1} parent=31 // pred_fallthru
          _
      $region32: #{tpu_custom_call.1} parent=5 // pred_fallthru
        _
      %p228 = scmp.le.s32.totalorder 2, %s12
      // Predicated region
      $region37: #{tpu_custom_call.1} parent=5 // pred_check
        %p229 = pneg %p228
      $region38: #{tpu_custom_call.1} parent=5 // pred_check_branch
        %231 = sbr.rel (%p229) target = $region40
      $region39: #{tpu_custom_call.1} parent=5 // pred_region
        %s232 = ssub.s32 %s12, 2
        // Predicated region
        $region41: #{tpu_custom_call.1} parent=39 // pred_check
          %p233 = pneg %p109
        $region42: #{tpu_custom_call.1} parent=39 // pred_check_branch
          %235 = sbr.rel (%p233) target = $region44
        $region43: #{tpu_custom_call.1} parent=39 // pred_region
          %s236 = sand.u32 %s94, 1
          %s237 = scalar_lea.sflag [#allocation3], %s236
          %s238 = sand.u32 %s94, 1
          %s239 = smul.addr %s238, 8
          %s240 = scalar_lea.vmem [#allocation2], %s239
          %242 = dma.done %s237, 128
        $region44: #{tpu_custom_call.1} parent=39 // pred_fallthru
          _
      $region40: #{tpu_custom_call.1} parent=5 // pred_fallthru
        _
    $region6: #{tpu_custom_call.1} parent=1 // loop_footer
      %s16 = sadd.s32 1, %s12
    $region7: #{tpu_custom_call.1} parent=1 // loop_footer_branch
      %11 = sbr.rel target = $region3
    $region8: #{tpu_custom_call.1} parent=1 // loop_exit
      _
    %243 = vsyncpa [#allocation3], 1
    %s244 = scalar_lea.sflag [#allocation3], 1
    %245 = vsyncpa %s244, 1

</llo_original>
